<compile_context>
chip_gen: v7x
topology: tpu7x:2x2x1
jax: 0.10.0
libtpu: 0.0.40
codegen_flags: <defaults>
</compile_context>

<pallas_src>
import math
import jax
import jax.numpy as jnp
from jax.experimental import pallas as pl
from jax.experimental.pallas import tpu as pltpu

EPS = 1e-5                      # torch.nn.LayerNorm default
INV_SQRT2 = 1.0 / math.sqrt(2.0)


def _round_up(a, b):
    return ((a + b - 1) // b) * b


def _ffn_kernel(x_ref, ln_w_ref, ln_b_ref, w1_ref, b1_ref, w2_ref, b2_ref,
                o_ref, xn_ref, acc_ref):
    # Grid: (token tiles, hidden-dim chunks); hidden axis is the reduction.
    k = pl.program_id(1)

    @pl.when(k == 0)
    def _():
        # ---- LayerNorm over last dim (torch semantics: biased var, eps=1e-5) ----
        x = x_ref[...].astype(jnp.float32)
        mean = jnp.mean(x, axis=-1, keepdims=True)
        var = jnp.mean((x - mean) ** 2, axis=-1, keepdims=True)
        xn = (x - mean) * jax.lax.rsqrt(var + EPS)
        xn = xn * ln_w_ref[...] + ln_b_ref[...]
        # Cache normalized activations (bf16 for the MXU) and zero the accumulator.
        xn_ref[...] = xn.astype(xn_ref.dtype)
        acc_ref[...] = jnp.zeros_like(acc_ref)

    # ---- Linear(dim -> tile_h chunk) on MXU, bf16 inputs, f32 accumulate ----
    h = jnp.dot(xn_ref[...], w1_ref[...], preferred_element_type=jnp.float32)
    h = h + b1_ref[...]                                  # chunk-local bias

    # ---- exact (erf) GELU, matching nn.GELU() default ----
    h = 0.5 * h * (1.0 + jax.lax.erf(h * INV_SQRT2))

    # ---- Linear(tile_h chunk -> dim), accumulated in f32 VMEM scratch ----
    acc_ref[...] += jnp.dot(h.astype(w2_ref.dtype), w2_ref[...],
                            preferred_element_type=jnp.float32)

    @pl.when(k == pl.num_programs(1) - 1)
    def _():
        # b2 applied exactly once, at finalize.
        o_ref[...] = (acc_ref[...] + b2_ref[...]).astype(o_ref.dtype)


def feedforward_pallas(x, ln_w, ln_b, w1, b1, w2, b2, *, tile_n=256, tile_h=512):
    """x: (batch, seq, dim). Returns (batch, seq, dim)."""
    B, S, D = x.shape
    H = w1.shape[1]
    N = B * S

    # Clamp tiles to the (aligned) problem size, then pad up to a whole tile.
    tile_n = min(tile_n, _round_up(N, 8))
    tile_h = min(tile_h, _round_up(H, 128))
    N_pad = _round_up(N, tile_n)
    H_pad = _round_up(H, tile_h)

    x2 = x.reshape(N, D)
    if N_pad != N:
        x2 = jnp.pad(x2, ((0, N_pad - N), (0, 0)))

    # bf16 weights for the MXU (accumulation stays f32 in-kernel).
    w1p = w1.astype(jnp.bfloat16)
    w2p = w2.astype(jnp.bfloat16)
    b1p = b1.astype(jnp.float32)
    if H_pad != H:
        # Zero-padded hidden units: h = 0 + 0 -> gelu(0) = 0 -> contribute 0.
        w1p = jnp.pad(w1p, ((0, 0), (0, H_pad - H)))
        w2p = jnp.pad(w2p, ((0, H_pad - H), (0, 0)))
        b1p = jnp.pad(b1p, ((0, H_pad - H),))

    ln_w2 = ln_w.astype(jnp.float32).reshape(1, D)
    ln_b2 = ln_b.astype(jnp.float32).reshape(1, D)
    b1_2 = b1p.reshape(1, H_pad)
    b2_2 = b2.astype(jnp.float32).reshape(1, D)

    grid = (N_pad // tile_n, H_pad // tile_h)

    out = pl.pallas_call(
        _ffn_kernel,
        out_shape=jax.ShapeDtypeStruct((N_pad, D), x.dtype),
        grid_spec=pltpu.PrefetchScalarGridSpec(
            num_scalar_prefetch=0,
            grid=grid,
            in_specs=[
                pl.BlockSpec((tile_n, D), lambda i, k: (i, 0)),      # x tile (constant over k)
                pl.BlockSpec((1, D), lambda i, k: (0, 0)),           # ln weight
                pl.BlockSpec((1, D), lambda i, k: (0, 0)),           # ln bias
                pl.BlockSpec((D, tile_h), lambda i, k: (0, k)),      # W1 chunk
                pl.BlockSpec((1, tile_h), lambda i, k: (0, k)),      # b1 chunk
                pl.BlockSpec((tile_h, D), lambda i, k: (k, 0)),      # W2 chunk
                pl.BlockSpec((1, D), lambda i, k: (0, 0)),           # b2
            ],
            out_specs=pl.BlockSpec((tile_n, D), lambda i, k: (i, 0)),
            scratch_shapes=[
                pltpu.VMEM((tile_n, D), jnp.bfloat16),   # cached LayerNorm output
                pltpu.VMEM((tile_n, D), jnp.float32),    # f32 accumulator
            ],
        ),
        compiler_params=pltpu.CompilerParams(
            dimension_semantics=("parallel", "arbitrary"),
            vmem_limit_bytes=64 * 1024 * 1024,
        ),
    )(x2, ln_w2, ln_b2, w1p, b1_2, w2p, b2_2)

    if N_pad != N:
        out = out[:N]
    return out.reshape(B, S, D)


def feedforward_ref(x, ln_w, ln_b, w1, b1, w2, b2):
    xf = x.astype(jnp.float32)
    mean = jnp.mean(xf, axis=-1, keepdims=True)
    var = jnp.mean((xf - mean) ** 2, axis=-1, keepdims=True)
    xn = (xf - mean) * jax.lax.rsqrt(var + EPS) * ln_w + ln_b
    h = xn @ w1 + b1
    h = 0.5 * h * (1.0 + jax.lax.erf(h / math.sqrt(2.0)))
    return (h @ w2 + b2).astype(x.dtype)


if __name__ == "__main__":
    batch, seq, dim, hidden = 2, 8, 32, 64

    key = jax.random.PRNGKey(0)
    kx, kw1, kb1, kw2, kb2 = jax.random.split(key, 5)

    x = jax.random.normal(kx, (batch, seq, dim), dtype=jnp.float32)

    # Deterministic synthetic parameters (shapes per nn.LayerNorm / nn.Linear).
    ln_w = jnp.ones((dim,), jnp.float32)
    ln_b = jnp.zeros((dim,), jnp.float32)
    w1 = jax.random.normal(kw1, (dim, hidden), jnp.float32) * (1.0 / math.sqrt(dim))
    b1 = jax.random.normal(kb1, (hidden,), jnp.float32) * 0.01
    w2 = jax.random.normal(kw2, (hidden, dim), jnp.float32) * (1.0 / math.sqrt(hidden))
    b2 = jax.random.normal(kb2, (dim,), jnp.float32) * 0.01

    out = feedforward_pallas(x, ln_w, ln_b, w1, b1, w2, b2)
    out = jax.block_until_ready(out)

    ref = feedforward_ref(x, ln_w, ln_b, w1, b1, w2, b2)
    assert out.shape == (batch, seq, dim)
    # bf16 matmul inputs (f32 accumulation) -> slightly looser tolerance vs f32 ref.
    assert jnp.allclose(out, ref, atol=3e-2, rtol=3e-2), "mismatch vs reference"

    print("KERNEL_OK")
</pallas_src>

<mosaic_0001>
module attributes {stable_mosaic.version = 11 : i64} {
  func.func @_ffn_kernel(%arg0: i32, %arg1: i32, %arg2: memref<16x32xf32, #tpu.memory_space<vmem>>, %arg3: memref<1x32xf32, #tpu.memory_space<vmem>>, %arg4: memref<1x32xf32, #tpu.memory_space<vmem>>, %arg5: memref<32x128xbf16, #tpu.memory_space<vmem>>, %arg6: memref<1x128xf32, #tpu.memory_space<vmem>>, %arg7: memref<128x32xbf16, #tpu.memory_space<vmem>>, %arg8: memref<1x32xf32, #tpu.memory_space<vmem>>, %arg9: memref<16x32xf32, #tpu.memory_space<vmem>>, %arg10: memref<16x32xbf16, #tpu.memory_space<vmem>>, %arg11: memref<16x32xf32, #tpu.memory_space<vmem>>) attributes {dimension_semantics = [#tpu.dimension_semantics<parallel>, #tpu.dimension_semantics<arbitrary>], iteration_bounds = array<i64: 1, 1>, scalar_prefetch = 0 : i64, scratch_operands = 2 : i64, tpu.core_type = #tpu.core_type<tc>, window_params = [{transform_indices = @transform_0, window_bounds = array<i64: 16, 32>}, {pipeline_mode = #tpu.pipeline_mode<synchronous>, transform_indices = @transform_1, window_bounds = array<i64: 1, 32>}, {pipeline_mode = #tpu.pipeline_mode<synchronous>, transform_indices = @transform_2, window_bounds = array<i64: 1, 32>}, {transform_indices = @transform_3, window_bounds = array<i64: 32, 128>}, {transform_indices = @transform_4, window_bounds = array<i64: 1, 128>}, {transform_indices = @transform_5, window_bounds = array<i64: 128, 32>}, {pipeline_mode = #tpu.pipeline_mode<synchronous>, transform_indices = @transform_6, window_bounds = array<i64: 1, 32>}, {transform_indices = @transform_7, window_bounds = array<i64: 16, 32>}]} {
    %c0_i32 = arith.constant 0 : i32
    %0 = arith.cmpi eq, %arg1, %c0_i32 : i32
    %1 = arith.extui %0 : i1 to i32
    %c0_i32_0 = arith.constant 0 : i32
    %2 = arith.cmpi ne, %1, %c0_i32_0 : i32
    scf.if %2 {
      %c0_18 = arith.constant 0 : index
      %c0_19 = arith.constant 0 : index
      %26 = vector.load %arg2[%c0_18, %c0_19] : memref<16x32xf32, #tpu.memory_space<vmem>>, vector<16x32xf32>
      %cst_20 = arith.constant dense<0.000000e+00> : vector<16xf32>
      %27 = vector.multi_reduction <add>, %26, %cst_20 [1] : vector<16x32xf32> to vector<16xf32>
      %28 = vector.shape_cast %27 : vector<16xf32> to vector<16x1xf32>
      %cst_21 = arith.constant 3.200000e+01 : f32
      %29 = vector.broadcast %cst_21 : f32 to vector<16x1xf32>
      %30 = arith.divf %28, %29 : vector<16x1xf32>
      %31 = vector.broadcast %30 : vector<16x1xf32> to vector<16x32xf32>
      %32 = arith.subf %26, %31 : vector<16x32xf32>
      %33 = arith.mulf %32, %32 : vector<16x32xf32>
      %cst_22 = arith.constant dense<0.000000e+00> : vector<16xf32>
      %34 = vector.multi_reduction <add>, %33, %cst_22 [1] : vector<16x32xf32> to vector<16xf32>
      %35 = vector.shape_cast %34 : vector<16xf32> to vector<16x1xf32>
      %cst_23 = arith.constant 3.200000e+01 : f32
      %36 = vector.broadcast %cst_23 : f32 to vector<16x1xf32>
      %37 = arith.divf %35, %36 : vector<16x1xf32>
      %38 = vector.broadcast %30 : vector<16x1xf32> to vector<16x32xf32>
      %39 = arith.subf %26, %38 : vector<16x32xf32>
      %cst_24 = arith.constant 9.99999974E-6 : f32
      %40 = vector.broadcast %cst_24 : f32 to vector<16x1xf32>
      %41 = arith.addf %37, %40 : vector<16x1xf32>
      %42 = math.rsqrt %41 : vector<16x1xf32>
      %43 = vector.broadcast %42 : vector<16x1xf32> to vector<16x32xf32>
      %44 = arith.mulf %39, %43 : vector<16x32xf32>
      %c0_25 = arith.constant 0 : index
      %c0_26 = arith.constant 0 : index
      %45 = vector.load %arg3[%c0_25, %c0_26] : memref<1x32xf32, #tpu.memory_space<vmem>>, vector<1x32xf32>
      %46 = vector.broadcast %45 : vector<1x32xf32> to vector<16x32xf32>
      %47 = arith.mulf %44, %46 : vector<16x32xf32>
      %c0_27 = arith.constant 0 : index
      %c0_28 = arith.constant 0 : index
      %48 = vector.load %arg4[%c0_27, %c0_28] : memref<1x32xf32, #tpu.memory_space<vmem>>, vector<1x32xf32>
      %49 = vector.broadcast %48 : vector<1x32xf32> to vector<16x32xf32>
      %50 = arith.addf %47, %49 : vector<16x32xf32>
      %51 = arith.truncf %50 : vector<16x32xf32> to vector<16x32xbf16>
      %c0_29 = arith.constant 0 : index
      %c0_30 = arith.constant 0 : index
      %52 = vector.load %arg10[%c0_29, %c0_30] : memref<16x32xbf16, #tpu.memory_space<vmem>>, vector<16x32xbf16>
      tpu.vector_store %arg10[%c0_29, %c0_30], %51 {strides = array<i32>} : memref<16x32xbf16, #tpu.memory_space<vmem>>, vector<16x32xbf16>,
      %cst_31 = arith.constant 0.000000e+00 : f32
      %53 = vector.broadcast %cst_31 : f32 to vector<16x32xf32>
      %c0_32 = arith.constant 0 : index
      %c0_33 = arith.constant 0 : index
      %54 = vector.load %arg11[%c0_32, %c0_33] : memref<16x32xf32, #tpu.memory_space<vmem>>, vector<16x32xf32>
      tpu.vector_store %arg11[%c0_32, %c0_33], %53 {strides = array<i32>} : memref<16x32xf32, #tpu.memory_space<vmem>>, vector<16x32xf32>,
    } else {
    }
    %c0 = arith.constant 0 : index
    %c0_1 = arith.constant 0 : index
    %3 = vector.load %arg10[%c0, %c0_1] : memref<16x32xbf16, #tpu.memory_space<vmem>>, vector<16x32xbf16>
    %c0_2 = arith.constant 0 : index
    %c0_3 = arith.constant 0 : index
    %4 = vector.load %arg5[%c0_2, %c0_3] : memref<32x128xbf16, #tpu.memory_space<vmem>>, vector<32x128xbf16>
    %cst = arith.constant dense<0.000000e+00> : vector<16x128xf32>
    %5 = tpu.matmul %3, %4, %cst {dimension_numbers = #tpu.dot_dimension_numbers<[1], [0], [0], [1], [0, 0, 1, 1], [], []>} : vector<16x32xbf16>, vector<32x128xbf16>, vector<16x128xf32> -> vector<16x128xf32>
    %c0_4 = arith.constant 0 : index
    %c0_5 = arith.constant 0 : index
    %6 = vector.load %arg6[%c0_4, %c0_5] : memref<1x128xf32, #tpu.memory_space<vmem>>, vector<1x128xf32>
    %7 = vector.broadcast %6 : vector<1x128xf32> to vector<16x128xf32>
    %8 = arith.addf %5, %7 : vector<16x128xf32>
    %cst_6 = arith.constant 5.000000e-01 : f32
    %9 = vector.broadcast %cst_6 : f32 to vector<16x128xf32>
    %10 = arith.mulf %9, %8 : vector<16x128xf32>
    %cst_7 = arith.constant 0.707106769 : f32
    %11 = vector.broadcast %cst_7 : f32 to vector<16x128xf32>
    %12 = arith.mulf %8, %11 : vector<16x128xf32>
    %13 = math.erf %12 : vector<16x128xf32>
    %cst_8 = arith.constant 1.000000e+00 : f32
    %14 = vector.broadcast %cst_8 : f32 to vector<16x128xf32>
    %15 = arith.addf %14, %13 : vector<16x128xf32>
    %16 = arith.mulf %10, %15 : vector<16x128xf32>
    %c0_9 = arith.constant 0 : index
    %c0_10 = arith.constant 0 : index
    %17 = vector.load %arg11[%c0_9, %c0_10] : memref<16x32xf32, #tpu.memory_space<vmem>>, vector<16x32xf32>
    %18 = arith.truncf %16 : vector<16x128xf32> to vector<16x128xbf16>
    %c0_11 = arith.constant 0 : index
    %c0_12 = arith.constant 0 : index
    %19 = vector.load %arg7[%c0_11, %c0_12] : memref<128x32xbf16, #tpu.memory_space<vmem>>, vector<128x32xbf16>
    %cst_13 = arith.constant dense<0.000000e+00> : vector<16x32xf32>
    %20 = tpu.matmul %18, %19, %cst_13 {dimension_numbers = #tpu.dot_dimension_numbers<[1], [0], [0], [1], [0, 0, 1, 1], [], []>} : vector<16x128xbf16>, vector<128x32xbf16>, vector<16x32xf32> -> vector<16x32xf32>
    %21 = arith.addf %17, %20 : vector<16x32xf32>
    %c0_14 = arith.constant 0 : index
    %c0_15 = arith.constant 0 : index
    %22 = vector.load %arg11[%c0_14, %c0_15] : memref<16x32xf32, #tpu.memory_space<vmem>>, vector<16x32xf32>
    tpu.vector_store %arg11[%c0_14, %c0_15], %21 {strides = array<i32>} : memref<16x32xf32, #tpu.memory_space<vmem>>, vector<16x32xf32>,
    %c0_i32_16 = arith.constant 0 : i32
    %23 = arith.cmpi eq, %arg1, %c0_i32_16 : i32
    %24 = arith.extui %23 : i1 to i32
    %c0_i32_17 = arith.constant 0 : i32
    %25 = arith.cmpi ne, %24, %c0_i32_17 : i32
    scf.if %25 {
      %c0_18 = arith.constant 0 : index
      %c0_19 = arith.constant 0 : index
      %26 = vector.load %arg11[%c0_18, %c0_19] : memref<16x32xf32, #tpu.memory_space<vmem>>, vector<16x32xf32>
      %c0_20 = arith.constant 0 : index
      %c0_21 = arith.constant 0 : index
      %27 = vector.load %arg8[%c0_20, %c0_21] : memref<1x32xf32, #tpu.memory_space<vmem>>, vector<1x32xf32>
      %28 = vector.broadcast %27 : vector<1x32xf32> to vector<16x32xf32>
      %29 = arith.addf %26, %28 : vector<16x32xf32>
      %c0_22 = arith.constant 0 : index
      %c0_23 = arith.constant 0 : index
      %30 = vector.load %arg9[%c0_22, %c0_23] : memref<16x32xf32, #tpu.memory_space<vmem>>, vector<16x32xf32>
      tpu.vector_store %arg9[%c0_22, %c0_23], %29 {strides = array<i32>} : memref<16x32xf32, #tpu.memory_space<vmem>>, vector<16x32xf32>,
    } else {
    }
    return
  }
  func.func @transform_0(%arg0: i32, %arg1: i32) -> (i32, i32) {
    %c0_i32 = arith.constant 0 : i32
    %c0_i32_0 = arith.constant 0 : i32
    return %arg0, %c0_i32 : i32, i32
  }
  func.func @transform_1(%arg0: i32, %arg1: i32) -> (i32, i32) {
    %c0_i32 = arith.constant 0 : i32
    %c0_i32_0 = arith.constant 0 : i32
    %c0_i32_1 = arith.constant 0 : i32
    return %c0_i32, %c0_i32_0 : i32, i32
  }
  func.func @transform_2(%arg0: i32, %arg1: i32) -> (i32, i32) {
    %c0_i32 = arith.constant 0 : i32
    %c0_i32_0 = arith.constant 0 : i32
    %c0_i32_1 = arith.constant 0 : i32
    return %c0_i32, %c0_i32_0 : i32, i32
  }
  func.func @transform_3(%arg0: i32, %arg1: i32) -> (i32, i32) {
    %c0_i32 = arith.constant 0 : i32
    %c0_i32_0 = arith.constant 0 : i32
    return %c0_i32, %arg1 : i32, i32
  }
  func.func @transform_4(%arg0: i32, %arg1: i32) -> (i32, i32) {
    %c0_i32 = arith.constant 0 : i32
    %c0_i32_0 = arith.constant 0 : i32
    return %c0_i32, %arg1 : i32, i32
  }
  func.func @transform_5(%arg0: i32, %arg1: i32) -> (i32, i32) {
    %c0_i32 = arith.constant 0 : i32
    %c0_i32_0 = arith.constant 0 : i32
    return %arg1, %c0_i32 : i32, i32
  }
  func.func @transform_6(%arg0: i32, %arg1: i32) -> (i32, i32) {
    %c0_i32 = arith.constant 0 : i32
    %c0_i32_0 = arith.constant 0 : i32
    %c0_i32_1 = arith.constant 0 : i32
    return %c0_i32, %c0_i32_0 : i32, i32
  }
  func.func @transform_7(%arg0: i32, %arg1: i32) -> (i32, i32) {
    %c0_i32 = arith.constant 0 : i32
    %c0_i32_0 = arith.constant 0 : i32
    return %arg0, %c0_i32 : i32, i32
  }
}

</mosaic_0001>

<llo_original>
// kernel: tpu_custom_call.1
$region0: #{tpu_custom_call.1}
  #allocation0 [shape = 'u32[]', space=smem, size = 0x4, offset = 0x4, fixed_abs, tag = 'smem constant byte address 0x4 - core index']
  #allocation1 [shape = 'u32[144,128]{1,0:T(1,128)}', space=vmem, size = 0x12000, scoped, tag = 'internal scratch']
  #allocation2 [shape = 'bf16[16,32]{1,0:T(16,128)(2,1)}', space=vmem, size = 0x1000, scoped, tag = 'scratch operand']
  #allocation3 [shape = 'f32[16,32]{1,0:T(8,128)}', space=vmem, size = 0x2000, scoped, tag = 'scratch operand']
  %s0 = inlined_call_operand.hbm [shape: f32[16,32], index: 0, kind: input, shape index: {}]
  %s1 = inlined_call_operand.hbm [shape: f32[1,32], index: 1, kind: input, shape index: {}]
  %s2 = inlined_call_operand.hbm [shape: f32[1,32], index: 2, kind: input, shape index: {}]
  %s3 = inlined_call_operand.hbm [shape: bf16[32,128], index: 3, kind: input, shape index: {}]
  %s4 = inlined_call_operand.hbm [shape: f32[1,128], index: 4, kind: input, shape index: {}]
  %s5 = inlined_call_operand.hbm [shape: bf16[128,32], index: 5, kind: input, shape index: {}]
  %s6 = inlined_call_operand.hbm [shape: f32[1,32], index: 6, kind: input, shape index: {}]
  %s7 = inlined_call_operand.hbm [shape: f32[16,32], index: 7, kind: output, shape index: {}]
  %s8 = sld [smem:[#allocation0]]
  $region74: #{tpu_custom_call.1} parent=0
    _
  %s10 = ssub.s32 1, %s8
  %s11 = scalar_select 0, %s10, %s8
  $region1: #{tpu_custom_call.1} parent=0
    #allocation4 [shape = 'u8[8192]{0}', space=vmem, size = 0x2000, scoped, tag = 'input window, operand 0, single buffered']
    #allocation5 [shape = 's32[1]{0}', space=sflag, size = 0x4, scoped, tag = 'scoped memory for tpu_custom_call.1']
    #allocation6 [shape = 's32[1]{0}', space=sflag, size = 0x4, scoped, tag = 'scoped memory for tpu_custom_call.1']
    #allocation7 [shape = 'u8[512]{0}', space=vmem, size = 0x400, scoped, tag = 'input window, operand 1, single buffered']
    #allocation8 [shape = 's32[1]{0}', space=sflag, size = 0x4, scoped, tag = 'scoped memory for tpu_custom_call.1']
    #allocation9 [shape = 'u8[512]{0}', space=vmem, size = 0x400, scoped, tag = 'input window, operand 2, single buffered']
    #allocation10 [shape = 'u8[8192]{0}', space=vmem, size = 0x2000, scoped, tag = 'input window, operand 3, single buffered']
    #allocation11 [shape = 's32[1]{0}', space=sflag, size = 0x4, scoped, tag = 'scoped memory for tpu_custom_call.1']
    #allocation12 [shape = 'u8[512]{0}', space=vmem, size = 0x400, scoped, tag = 'input window, operand 4, single buffered']
    #allocation13 [shape = 'u8[32768]{0}', space=vmem, size = 0x8000, scoped, tag = 'input window, operand 5, single buffered']
    #allocation14 [shape = 's32[1]{0}', space=sflag, size = 0x4, scoped, tag = 'scoped memory for tpu_custom_call.1']
    #allocation15 [shape = 'u8[512]{0}', space=vmem, size = 0x400, scoped, tag = 'input window, operand 6, single buffered']
    #allocation16 [shape = 'u8[8192]{0}', space=vmem, size = 0x2000, scoped, tag = 'output window, operand 0, single buffered']
    %12 = vsyncpa [#allocation5], 0
    %13 = vsyncpa [#allocation8], 0
    %14 = vsyncpa [#allocation11], 0
    %15 = vsyncpa [#allocation14], 0
    %16 = vsyncpa [#allocation6], 0
    // Predicated region
    $region2: #{tpu_custom_call.1} parent=1 // pred_check
      _
    $region3: #{tpu_custom_call.1} parent=1 // pred_check_branch
      %18 = sbr.rel (0) target = $region5
    $region4: #{tpu_custom_call.1} parent=1 // pred_region
      %s20 = ssub.s32 256, 256
      %21 = vsyncadd [#allocation5], %s20
      %s22 = sshll.u32 [#allocation4], 4
      %s23 = int_to_ptr.vmem [resolvable:$true] %s22
      %28 = dma.hbm_to_vmem [thread:$0]  %s0, 256, %s23, [#allocation5], 128, 128, 8
    $region5: #{tpu_custom_call.1} parent=1 // pred_fallthru
      _
    // Predicated region
    $region6: #{tpu_custom_call.1} parent=1 // pred_check
      _
    $region7: #{tpu_custom_call.1} parent=1 // pred_check_branch
      %30 = sbr.rel (0) target = $region9
    $region8: #{tpu_custom_call.1} parent=1 // pred_region
      %s32 = ssub.s32 16, 16
      %33 = vsyncadd [#allocation8], %s32
      %s35 = sshll.u32 [#allocation7], 4
      %s36 = int_to_ptr.vmem [resolvable:$true] %s35
      %38 = dma.hbm_to_vmem [thread:$0]  %s1, 16, %s36, [#allocation8]
    $region9: #{tpu_custom_call.1} parent=1 // pred_fallthru
      _
    // Predicated region
    $region10: #{tpu_custom_call.1} parent=1 // pred_check
      _
    $region11: #{tpu_custom_call.1} parent=1 // pred_check_branch
      %40 = sbr.rel (0) target = $region13
    $region12: #{tpu_custom_call.1} parent=1 // pred_region
      %s42 = ssub.s32 16, 16
      %43 = vsyncadd [#allocation8], %s42
      %s45 = sshll.u32 [#allocation9], 4
      %s46 = int_to_ptr.vmem [resolvable:$true] %s45
      %48 = dma.hbm_to_vmem [thread:$0]  %s2, 16, %s46, [#allocation8]
    $region13: #{tpu_custom_call.1} parent=1 // pred_fallthru
      _
    // Predicated region
    $region14: #{tpu_custom_call.1} parent=1 // pred_check
      _
    $region15: #{tpu_custom_call.1} parent=1 // pred_check_branch
      %50 = sbr.rel (0) target = $region17
    $region16: #{tpu_custom_call.1} parent=1 // pred_region
      %s52 = ssub.s32 256, 256
      %53 = vsyncadd [#allocation11], %s52
      %s54 = sshll.u32 [#allocation10], 4
      %s55 = int_to_ptr.vmem [resolvable:$true] %s54
      %60 = dma.hbm_to_vmem [thread:$0]  %s3, 256, %s55, [#allocation11], 64, 64, 4
    $region17: #{tpu_custom_call.1} parent=1 // pred_fallthru
      _
    // Predicated region
    $region18: #{tpu_custom_call.1} parent=1 // pred_check
      _
    $region19: #{tpu_custom_call.1} parent=1 // pred_check_branch
      %62 = sbr.rel (0) target = $region21
    $region20: #{tpu_custom_call.1} parent=1 // pred_region
      %s64 = ssub.s32 16, 16
      %65 = vsyncadd [#allocation11], %s64
      %s67 = sshll.u32 [#allocation12], 4
      %s68 = int_to_ptr.vmem [resolvable:$true] %s67
      %70 = dma.hbm_to_vmem [thread:$0]  %s4, 16, %s68, [#allocation11]
    $region21: #{tpu_custom_call.1} parent=1 // pred_fallthru
      _
    // Predicated region
    $region22: #{tpu_custom_call.1} parent=1 // pred_check
      _
    $region23: #{tpu_custom_call.1} parent=1 // pred_check_branch
      %72 = sbr.rel (0) target = $region25
    $region24: #{tpu_custom_call.1} parent=1 // pred_region
      %s74 = ssub.s32 1024, 1024
      %75 = vsyncadd [#allocation14], %s74
      %s76 = sshll.u32 [#allocation13], 4
      %s77 = int_to_ptr.vmem [resolvable:$true] %s76
      %82 = dma.hbm_to_vmem [thread:$0]  %s5, 1024, %s77, [#allocation14], 64, 64, 4
    $region25: #{tpu_custom_call.1} parent=1 // pred_fallthru
      _
    // Predicated region
    $region26: #{tpu_custom_call.1} parent=1 // pred_check
      _
    $region27: #{tpu_custom_call.1} parent=1 // pred_check_branch
      %84 = sbr.rel (0) target = $region29
    $region28: #{tpu_custom_call.1} parent=1 // pred_region
      %s86 = ssub.s32 16, 16
      %87 = vsyncadd [#allocation14], %s86
      %s89 = sshll.u32 [#allocation15], 4
      %s90 = int_to_ptr.vmem [resolvable:$true] %s89
      %92 = dma.hbm_to_vmem [thread:$0]  %s6, 16, %s90, [#allocation14]
    $region29: #{tpu_custom_call.1} parent=1 // pred_fallthru
      _
    // Predicated region
    $region30: #{tpu_custom_call.1} parent=1 // pred_check
      _
    $region31: #{tpu_custom_call.1} parent=1 // pred_check_branch
      %94 = sbr.rel (0) target = $region33
    $region32: #{tpu_custom_call.1} parent=1 // pred_region
      %95 = dma.done [#allocation5], 256
    $region33: #{tpu_custom_call.1} parent=1 // pred_fallthru
      _
    // Predicated region
    $region34: #{tpu_custom_call.1} parent=1 // pred_check
      _
    $region35: #{tpu_custom_call.1} parent=1 // pred_check_branch
      %97 = sbr.rel (0) target = $region37
    $region36: #{tpu_custom_call.1} parent=1 // pred_region
      %98 = dma.done [#allocation8], 16
    $region37: #{tpu_custom_call.1} parent=1 // pred_fallthru
      _
    // Predicated region
    $region38: #{tpu_custom_call.1} parent=1 // pred_check
      _
    $region39: #{tpu_custom_call.1} parent=1 // pred_check_branch
      %100 = sbr.rel (0) target = $region41
    $region40: #{tpu_custom_call.1} parent=1 // pred_region
      %101 = dma.done [#allocation8], 16
    $region41: #{tpu_custom_call.1} parent=1 // pred_fallthru
      _
    // Predicated region
    $region42: #{tpu_custom_call.1} parent=1 // pred_check
      _
    $region43: #{tpu_custom_call.1} parent=1 // pred_check_branch
      %103 = sbr.rel (0) target = $region45
    $region44: #{tpu_custom_call.1} parent=1 // pred_region
      %104 = dma.done [#allocation11], 256
    $region45: #{tpu_custom_call.1} parent=1 // pred_fallthru
      _
    // Predicated region
    $region46: #{tpu_custom_call.1} parent=1 // pred_check
      _
    $region47: #{tpu_custom_call.1} parent=1 // pred_check_branch
      %106 = sbr.rel (0) target = $region49
    $region48: #{tpu_custom_call.1} parent=1 // pred_region
      %107 = dma.done [#allocation11], 16
    $region49: #{tpu_custom_call.1} parent=1 // pred_fallthru
      _
    // Predicated region
    $region50: #{tpu_custom_call.1} parent=1 // pred_check
      _
    $region51: #{tpu_custom_call.1} parent=1 // pred_check_branch
      %109 = sbr.rel (0) target = $region53
    $region52: #{tpu_custom_call.1} parent=1 // pred_region
      %110 = dma.done [#allocation14], 1024
    $region53: #{tpu_custom_call.1} parent=1 // pred_fallthru
      _
    // Predicated region
    $region54: #{tpu_custom_call.1} parent=1 // pred_check
      _
    $region55: #{tpu_custom_call.1} parent=1 // pred_check_branch
      %112 = sbr.rel (0) target = $region57
    $region56: #{tpu_custom_call.1} parent=1 // pred_region
      %113 = dma.done [#allocation14], 16
    $region57: #{tpu_custom_call.1} parent=1 // pred_fallthru
      _
    %p115 = scmp.eq.s32.totalorder 0, 0
    // Predicated region
    $region58: #{tpu_custom_call.1} parent=1 // pred_check
      %p116 = pneg %p115
    $region59: #{tpu_custom_call.1} parent=1 // pred_check_branch
      %118 = sbr.rel (%p116) target = $region61
    $region60: #{tpu_custom_call.1} parent=1 // pred_region
      %v119 = vld [vmem:[#allocation4] sm:$0xff]
      %v120 = vld [vmem:[#allocation4 + $0x8] sm:$0xff]
      %vm121 = vcmask 261120
      %v122 = vsel %vm121, %v119, 0.0
      %123 = vadd.xlane.f32.xlu0 %v122
      %v124 = vpop.xlane.xlu0 %123
      %v125 = vsel %vm121, %v120, 0.0
      %126 = vadd.xlane.f32.xlu0 %v125
      %v127 = vpop.xlane.xlu0 %126
      %v128 = vrcp.pop 32.0
      %v129 = vmul.f32 %v124, %v128
      %v130 = vmul.f32 %v127, %v128
      %v131 = vsub.f32 %v119, %v129
      %v132 = vsub.f32 %v120, %v130
      %v133 = vmul.f32 %v131, %v131
      %v134 = vmul.f32 %v132, %v132
      %v135 = vsel %vm121, %v133, 0.0
      %136 = vadd.xlane.f32.xlu0 %v135
      %v137 = vpop.xlane.xlu0 %136
      %v138 = vsel %vm121, %v134, 0.0
      %139 = vadd.xlane.f32.xlu0 %v138
      %v140 = vpop.xlane.xlu0 %139
      %v141 = vmul.f32 %v137, %v128
      %v142 = vmul.f32 %v140, %v128
      %v143 = vadd.f32 %v141, 1e-05
      %v144 = vadd.f32 %v142, 1e-05
      %v145 = vrsqrt.pop %v143
      %v146 = vrsqrt.pop %v144
      %v147 = vmul.f32 %v131, %v145
      %v148 = vmul.f32 %v132, %v146
      %v149 = vld [vmem:[#allocation7] sm:$0x1]
      %v151 = vlaneseq
      %v152 = vshrl.u32 %v151, 7
      %v153 = vsub.s32 0, %v152
      %v154 = vrot.slane %v149, %v153
      %v156 = vmul.f32 %v147, %v154
      %v157 = vmul.f32 %v148, %v154
      %v158 = vld [vmem:[#allocation9] sm:$0x1]
      %v160 = vlaneseq
      %v161 = vshrl.u32 %v160, 7
      %v162 = vsub.s32 0, %v161
      %v163 = vrot.slane %v158, %v162
      %v165 = vadd.f32 %v156, %v163
      %v166 = vadd.f32 %v157, %v163
      %v167 = vpack.c.bf16 %v166, %v165
      %168 = vst.msk [vmem:[#allocation2] sm:$0xff] %vm121, %v167
      %169 = vst.msk [vmem:[#allocation3] sm:$0xff] %vm121, 0.0
      %170 = vst.msk [vmem:[#allocation3 + $0x8] sm:$0xff] %vm121, 0.0
    $region61: #{tpu_custom_call.1} parent=1 // pred_fallthru
      _
    %v171 = vld [vmem:[#allocation2] sm:$0xff]
    %v172 = vld [vmem:[#allocation10] sm:$0xf]
    %v173 = vld [vmem:[#allocation10 + $0x4] sm:$0xf]
    %v174 = vld [vmem:[#allocation10 + $0x8] sm:$0xf]
    %v175 = vld [vmem:[#allocation10 + $0xc] sm:$0xf]
    %v176 = vld [vmem:[#allocation12] sm:$0x1]
    %v178 = vlaneseq
    %v179 = vshrl.u32 %v178, 7
    %v180 = vsub.s32 0, %v179
    %v181 = vrot.slane %v176, %v180
    %v187 = vunpack.c.l.b16 %v172
    %v188 = vunpack.c.l.b16 %v173
    %v189 = vunpack.c.l.b16 %v174
    %v190 = vunpack.c.l.b16 %v175
    %v191 = vpack.c.b16 %v188, %v187
    %v192 = vpack.c.b16 %v190, %v189
    %vm195 = vcmask 261120
    %v197 = vsel %vm195, %v171, 0
    %199 = vmatprep.subr.bf16.mxu0 0
    %200 = vmatpush1.bf16.msra.mxu0 %v191
    %201 = vmatprep.subr.bf16.mxu0 0
    %202 = vmatpush1.bf16.msra.mxu0 %v192
    %203 = vmatprep.subr.bf16.mxu0 0
    %204 = vmatpush1.bf16.msra.mxu0 0
    %205 = vmatprep.subr.bf16.mxu0 0
    %206 = vmatpush1.bf16.msra.mxu0 0
    %207 = vmatprep.subr.bf16.mxu0 0
    %208 = vmatpush1.bf16.msra.mxu0 0
    %209 = vmatprep.subr.bf16.mxu0 0
    %210 = vmatpush1.bf16.msra.mxu0 0
    %211 = vmatprep.subr.bf16.mxu0 0
    %212 = vmatpush1.bf16.msra.mxu0 0
    %213 = vmatprep.subr.bf16.mxu0 0
    %214 = vmatpush1.bf16.msra.mxu0 0
    %215 = vmatprep.subr.bf16.mxu0 0
    %216 = vmatpush1.bf16.msra.mxu0 0
    %217 = vmatprep.subr.bf16.mxu0 0
    %218 = vmatpush1.bf16.msra.mxu0 0
    %219 = vmatprep.subr.bf16.mxu0 0
    %220 = vmatpush1.bf16.msra.mxu0 0
    %221 = vmatprep.subr.bf16.mxu0 0
    %222 = vmatpush1.bf16.msra.mxu0 0
    %223 = vmatprep.subr.bf16.mxu0 0
    %224 = vmatpush1.bf16.msra.mxu0 0
    %225 = vmatprep.subr.bf16.mxu0 0
    %226 = vmatpush1.bf16.msra.mxu0 0
    %227 = vmatprep.subr.bf16.mxu0 0
    %228 = vmatpush1.bf16.msra.mxu0 0
    %229 = vmatprep.subr.bf16.mxu0 0
    %230 = vmatpush1.bf16.msra.mxu0 0
    %231 = vmatprep.mubr.bf16.mxu0 0
    %232 = vmatmul.mubr.bf16.gmra.mrb[0].mxu0 %v197
    %v233 = vpop.f32.mrb[0].mxu0
    %v234 = vadd.f32 %v181, %v233
    %v235 = vpop.f32.mrb[0].mxu0
    %v236 = vpop.f32.mrb[0].mxu0
    %v237 = vadd.f32 %v181, %v236
    %v238 = vpop.f32.mrb[0].mxu0
    %239 = vdwg.mxu0
    %v240 = vmul.f32 %v234, 0.5
    %v241 = vmul.f32 %v237, 0.5
    %v242 = vmul.f32 %v234, 0.70710677
    %v243 = vmul.f32 %v237, 0.70710677
    %v244 = verf.f32.pop %v242
    %v245 = verf.f32.pop %v243
    %v246 = vadd.f32 %v244, 1.0
    %v247 = vadd.f32 %v245, 1.0
    %v248 = vmul.f32 %v240, %v246
    %v249 = vmul.f32 %v241, %v247
    %v250 = vld [vmem:[#allocation3] sm:$0xff]
    %v251 = vld [vmem:[#allocation3 + $0x8] sm:$0xff]
    %v252 = vpack.c.bf16 %v249, %v248
    %v253 = vld [vmem:[#allocation13] sm:$0xf]
    %v254 = vld [vmem:[#allocation13 + $0x4] sm:$0xf]
    %v255 = vld [vmem:[#allocation13 + $0x8] sm:$0xf]
    %v256 = vld [vmem:[#allocation13 + $0xc] sm:$0xf]
    %v257 = vld [vmem:[#allocation13 + $0x10] sm:$0xf]
    %v258 = vld [vmem:[#allocation13 + $0x14] sm:$0xf]
    %v259 = vld [vmem:[#allocation13 + $0x18] sm:$0xf]
    %v260 = vld [vmem:[#allocation13 + $0x1c] sm:$0xf]
    %v261 = vld [vmem:[#allocation13 + $0x20] sm:$0xf]
    %v262 = vld [vmem:[#allocation13 + $0x24] sm:$0xf]
    %v263 = vld [vmem:[#allocation13 + $0x28] sm:$0xf]
    %v264 = vld [vmem:[#allocation13 + $0x2c] sm:$0xf]
    %v265 = vld [vmem:[#allocation13 + $0x30] sm:$0xf]
    %v266 = vld [vmem:[#allocation13 + $0x34] sm:$0xf]
    %v267 = vld [vmem:[#allocation13 + $0x38] sm:$0xf]
    %v268 = vld [vmem:[#allocation13 + $0x3c] sm:$0xf]
    %v285 = vunpack.c.l.b16 %v253
    %v286 = vunpack.c.l.b16 %v254
    %v287 = vunpack.c.l.b16 %v255
    %v288 = vunpack.c.l.b16 %v256
    %v289 = vunpack.c.l.b16 %v257
    %v290 = vunpack.c.l.b16 %v258
    %v291 = vunpack.c.l.b16 %v259
    %v292 = vunpack.c.l.b16 %v260
    %v293 = vunpack.c.l.b16 %v261
    %v294 = vunpack.c.l.b16 %v262
    %v295 = vunpack.c.l.b16 %v263
    %v296 = vunpack.c.l.b16 %v264
    %v297 = vunpack.c.l.b16 %v265
    %v298 = vunpack.c.l.b16 %v266
    %v299 = vunpack.c.l.b16 %v267
    %v300 = vunpack.c.l.b16 %v268
    %v301 = vpack.c.b16 %v286, %v285
    %v302 = vpack.c.b16 %v288, %v287
    %v303 = vpack.c.b16 %v290, %v289
    %v304 = vpack.c.b16 %v292, %v291
    %v305 = vpack.c.b16 %v294, %v293
    %v306 = vpack.c.b16 %v296, %v295
    %v307 = vpack.c.b16 %v298, %v297
    %v308 = vpack.c.b16 %v300, %v299
    %317 = vmatprep.subr.bf16.mxu0 0
    %318 = vmatpush1.bf16.msra.mxu0 %v301
    %319 = vmatprep.subr.bf16.mxu0 0
    %320 = vmatpush1.bf16.msra.mxu0 %v302
    %321 = vmatprep.subr.bf16.mxu0 0
    %322 = vmatpush1.bf16.msra.mxu0 %v303
    %323 = vmatprep.subr.bf16.mxu0 0
    %324 = vmatpush1.bf16.msra.mxu0 %v304
    %325 = vmatprep.subr.bf16.mxu0 0
    %326 = vmatpush1.bf16.msra.mxu0 %v305
    %327 = vmatprep.subr.bf16.mxu0 0
    %328 = vmatpush1.bf16.msra.mxu0 %v306
    %329 = vmatprep.subr.bf16.mxu0 0
    %330 = vmatpush1.bf16.msra.mxu0 %v307
    %331 = vmatprep.subr.bf16.mxu0 0
    %332 = vmatpush1.bf16.msra.mxu0 %v308
    %333 = vmatprep.subr.bf16.mxu0 0
    %334 = vmatpush1.bf16.msra.mxu0 0
    %335 = vmatprep.subr.bf16.mxu0 0
    %336 = vmatpush1.bf16.msra.mxu0 0
    %337 = vmatprep.subr.bf16.mxu0 0
    %338 = vmatpush1.bf16.msra.mxu0 0
    %339 = vmatprep.subr.bf16.mxu0 0
    %340 = vmatpush1.bf16.msra.mxu0 0
    %341 = vmatprep.subr.bf16.mxu0 0
    %342 = vmatpush1.bf16.msra.mxu0 0
    %343 = vmatprep.subr.bf16.mxu0 0
    %344 = vmatpush1.bf16.msra.mxu0 0
    %345 = vmatprep.subr.bf16.mxu0 0
    %346 = vmatpush1.bf16.msra.mxu0 0
    %347 = vmatprep.subr.bf16.mxu0 0
    %348 = vmatpush1.bf16.msra.mxu0 0
    %349 = vmatprep.mubr.bf16.mxu0 0
    %350 = vmatmul.mubr.bf16.gmra.mrb[0].mxu0 %v252
    %v351 = vpop.f32.mrb[0].mxu0
    %v352 = vadd.f32 0.0, %v351
    %v353 = vpop.f32.mrb[0].mxu0
    %v354 = vpop.f32.mrb[0].mxu0
    %v355 = vadd.f32 0.0, %v354
    %v356 = vpop.f32.mrb[0].mxu0
    %357 = vdwg.mxu0
    %v358 = vadd.f32 %v250, %v352
    %v359 = vadd.f32 %v251, %v355
    %360 = vst.msk [vmem:[#allocation3] sm:$0xff] %vm195, %v358
    %361 = vst.msk [vmem:[#allocation3 + $0x8] sm:$0xff] %vm195, %v359
    // Predicated region
    $region62: #{tpu_custom_call.1} parent=1 // pred_check
      %p362 = pneg %p115
    $region63: #{tpu_custom_call.1} parent=1 // pred_check_branch
      %364 = sbr.rel (%p362) target = $region65
    $region64: #{tpu_custom_call.1} parent=1 // pred_region
      %v365 = vld [vmem:[#allocation3] sm:$0xff]
      %v366 = vld [vmem:[#allocation3 + $0x8] sm:$0xff]
      %v367 = vld [vmem:[#allocation15] sm:$0x1]
      %v369 = vlaneseq
      %v370 = vshrl.u32 %v369, 7
      %v371 = vsub.s32 0, %v370
      %v372 = vrot.slane %v367, %v371
      %v374 = vadd.f32 %v365, %v372
      %v375 = vadd.f32 %v366, %v372
      %376 = vst.msk [vmem:[#allocation16] sm:$0xff] %vm195, %v374
      %377 = vst.msk [vmem:[#allocation16 + $0x8] sm:$0xff] %vm195, %v375
    $region65: #{tpu_custom_call.1} parent=1 // pred_fallthru
      _
    // Predicated region
    $region66: #{tpu_custom_call.1} parent=1 // pred_check
      _
    $region67: #{tpu_custom_call.1} parent=1 // pred_check_branch
      %379 = sbr.rel (0) target = $region69
    $region68: #{tpu_custom_call.1} parent=1 // pred_region
      %s381 = ssub.s32 256, 256
      %382 = vsyncadd [#allocation6], %s381
      %s383 = sshll.u32 [#allocation16], 4
      %s384 = int_to_ptr.vmem [resolvable:$true] %s383
      %389 = dma.vmem_to_hbm [thread:$0]  %s384, 256, %s7, [#allocation6], 128, 128, 8
    $region69: #{tpu_custom_call.1} parent=1 // pred_fallthru
      _
    // Predicated region
    $region70: #{tpu_custom_call.1} parent=1 // pred_check
      _
    $region71: #{tpu_custom_call.1} parent=1 // pred_check_branch
      %391 = sbr.rel (0) target = $region73
    $region72: #{tpu_custom_call.1} parent=1 // pred_region
      %392 = dma.done [#allocation6], 256
    $region73: #{tpu_custom_call.1} parent=1 // pred_fallthru
      _
    %393 = vsyncpa [#allocation5], 1
    %394 = vsyncpa [#allocation8], 1
    %395 = vsyncpa [#allocation11], 1
    %396 = vsyncpa [#allocation14], 1
    %397 = vsyncpa [#allocation6], 1

</llo_original>
